<compile_context>
chip_gen: v7x
topology: tpu7x:2x2x1
jax: 0.10.0
libtpu: 0.0.40
codegen_flags: <defaults>
</compile_context>

<pallas_src>
import math

import jax
import jax.numpy as jnp
from jax.experimental import pallas as pl
from jax.experimental.pallas import tpu as pltpu


_LANE = 128                        # TPU vreg lane width
_ROW_TILE = 2048                   # multiple of 32 -> unpadded tiles for f32/bf16/int8
_SINGLE_BLOCK_MAX_BYTES = 2 << 20  # tiny tensors: one block, no grid bookkeeping


# ------------------------- Pallas kernel -------------------------

def _linearize_copy_kernel(x_ref, o_ref):
    # Pure materializing copy of the current VMEM block.  The wrapper guarantees a
    # lane-dense layout whenever possible, so stores are unmasked full-width vst.
    o_ref[...] = x_ref[...]


# ------------------------- pallas_call dispatch -------------------------

def _materialize_2d(xf):
    """Materialize a 2-D slab via a Pallas VMEM copy (same shape/dtype/element order)."""
    R, C = xf.shape
    nbytes = xf.size * xf.dtype.itemsize

    if nbytes <= _SINGLE_BLOCK_MAX_BYTES:
        # Tiny path: whole array as one VMEM block, no grid, no per-step overhead.
        return pl.pallas_call(
            _linearize_copy_kernel,
            out_shape=jax.ShapeDtypeStruct((R, C), xf.dtype),
        )(xf)

    # Large path: row-tiled grid.  BlockSpec auto-pipelining double-buffers the
    # input and output tiles so DMA-in of tile i+1 overlaps DMA-out of tile i-1;
    # the "parallel" axis lets v7x shard the grid across both TensorCores.
    row_tile = min(_ROW_TILE, R)
    grid = (pl.cdiv(R, row_tile),)
    return pl.pallas_call(
        _linearize_copy_kernel,
        out_shape=jax.ShapeDtypeStruct((R, C), xf.dtype),
        grid=grid,
        in_specs=[pl.BlockSpec((row_tile, C), lambda i: (i, 0))],
        out_specs=pl.BlockSpec((row_tile, C), lambda i: (i, 0)),
        compiler_params=pltpu.CompilerParams(
            dimension_semantics=("parallel",)),
    )(xf)


# ------------------------- wrapper -------------------------

def linearize(x):
    """PyTorch `x.view(x.shape[0], -1)` for a contiguous tensor.

    Accepts any rank >= 1 input; returns (B, prod(rest)) in row-major
    (torch .view) element order, same dtype as the input.
    """
    B = x.shape[0]
    N = math.prod(x.shape[1:]) if x.ndim > 1 else 1
    total = B * N

    if total == 0:
        # Zero-sized tensors: nothing to materialize (empty blocks don't lower cleanly).
        return jnp.reshape(x, (B, N))

    # Row-major collapse == torch .view order on a contiguous tensor; free XLA
    # metadata op, no data movement.  Re-fold to a sublane/lane-dense (rows, 128)
    # slab when possible so the kernel copy is fully vreg-dense and unmasked.
    if total % _LANE == 0:
        xf = jnp.reshape(x, (total // _LANE, _LANE))
    else:
        xf = jnp.reshape(x, (B, N))

    out2d = _materialize_2d(xf)

    # Fold back to the (B, N) view shape (free metadata op again).
    return jnp.reshape(out2d, (B, N))


# ------------------------- test -------------------------

if __name__ == "__main__":
    key = jax.random.PRNGKey(0)
    x = jax.random.normal(key, (2, 4, 16, 16), jnp.float32)   # NCHW-style input

    fwd = jax.jit(linearize)
    out = fwd(x)
    jax.block_until_ready(out)

    assert out.shape == (2, 4 * 16 * 16), out.shape
    assert out.dtype == x.dtype
    # Exact check against the reference flatten (.view) semantics.
    assert bool(jnp.all(out == x.reshape(2, -1)))
    print("KERNEL_OK")
</pallas_src>

<mosaic_0001>
module attributes {stable_mosaic.version = 11 : i64} {
  func.func @_linearize_copy_kernel(%arg0: memref<16x128xf32, #tpu.memory_space<vmem>>, %arg1: memref<16x128xf32, #tpu.memory_space<vmem>>) attributes {dimension_semantics = [], scalar_prefetch = 0 : i64, scratch_operands = 0 : i64, tpu.core_type = #tpu.core_type<tc>} {
    %c0 = arith.constant 0 : index
    %c0_0 = arith.constant 0 : index
    %0 = vector.load %arg0[%c0, %c0_0] : memref<16x128xf32, #tpu.memory_space<vmem>>, vector<16x128xf32>
    %c0_1 = arith.constant 0 : index
    %c0_2 = arith.constant 0 : index
    %1 = vector.load %arg1[%c0_1, %c0_2] : memref<16x128xf32, #tpu.memory_space<vmem>>, vector<16x128xf32>
    tpu.vector_store %arg1[%c0_1, %c0_2], %0 {strides = array<i32>} : memref<16x128xf32, #tpu.memory_space<vmem>>, vector<16x128xf32>,
    return
  }
}

</mosaic_0001>

<llo_original>
// kernel: linearize.1
$region0: #{linearize.1}
  #allocation0 [shape = 'u32[]', space=smem, size = 0x4, offset = 0x4, fixed_abs, tag = 'smem constant byte address 0x4 - core index']
  #allocation1 [shape = 'u32[144,128]{1,0:T(1,128)}', space=vmem, size = 0x12000, scoped, tag = 'internal scratch']
  %s0 = inlined_call_operand.vmem [shape: f32[16,128], index: 0, kind: input, shape index: {}]
  %s1 = inlined_call_operand.vmem [shape: f32[16,128], index: 1, kind: output, shape index: {}]
  %s2 = sld [smem:[#allocation0]]
  $region14: #{linearize.1} parent=0
    _
  %s4 = ssub.s32 1, %s2
  %s5 = scalar_select 0, %s4, %s2
  // Predicated region
  $region2: #{linearize.1} parent=0 // pred_check
    _
  $region3: #{linearize.1} parent=0 // pred_check_branch
    %7 = sbr.rel (0) target = $region5
  $region4: #{linearize.1} parent=0 // pred_region
    _
  $region5: #{linearize.1} parent=0 // pred_fallthru
    _
  %v8 = vld [vmem:[%s0] sm:$0xff]
  %v9 = vld [vmem:[%s0 + $0x8] sm:$0xff]
  %10 = vst [vmem:[%s1] sm:$0xff] %v8
  %11 = vst [vmem:[%s1 + $0x8] sm:$0xff] %v9
  // Predicated region
  $region6: #{linearize.1} parent=0 // pred_check
    _
  $region7: #{linearize.1} parent=0 // pred_check_branch
    %13 = sbr.rel (0) target = $region9
  $region8: #{linearize.1} parent=0 // pred_region
    _
  $region9: #{linearize.1} parent=0 // pred_fallthru
    _
  // Predicated region
  $region10: #{linearize.1} parent=0 // pred_check
    _
  $region11: #{linearize.1} parent=0 // pred_check_branch
    %15 = sbr.rel (0) target = $region13
  $region12: #{linearize.1} parent=0 // pred_region
    _
  $region13: #{linearize.1} parent=0 // pred_fallthru
    _

</llo_original>
